<compile_context>
chip_gen: v6e
topology: v6e:2x2x1
jax: 0.10.0
libtpu: 0.0.40
codegen_flags: <defaults>
</compile_context>

<pallas_src>
import functools
import math

import jax
import jax.numpy as jnp
from jax.experimental import pallas as pl
from jax.experimental.pallas import tpu as pltpu


def attn_kernel(*refs, masked):
    if masked:
        enc_ref, we_ref, hb_ref, v_ref, len_ref, out_ref = refs
    else:
        enc_ref, we_ref, hb_ref, v_ref, out_ref = refs
        len_ref = None

    bb, t, h = enc_ref.shape

    # One large MXU matmul per grid step: bf16 operands (cast in-kernel), f32 accumulation.
    # With t % 8 == 0 the (bb, t, h) <-> (bb*t, h) reshapes are free sublane regroupings.
    enc = enc_ref[...].reshape(bb * t, h).astype(jnp.bfloat16)
    pre = jnp.dot(enc, we_ref[...], preferred_element_type=jnp.float32)      # (bb*t, h)
    pre = pre.reshape(bb, t, h) + hb_ref[...][:, None, :]                    # + hidden proj + bias
    energy = jnp.tanh(pre)                                                   # EUP, f32

    # v-reduction over H (one VPU mul + lane reduction per element; free slack while HBM-bound).
    # TODO(synk): on v7x consider energy.astype(bf16) @ v on the MXU to unload VALU/XLU.
    scores = jnp.sum(energy * v_ref[...][None], axis=-1)                     # (bb, t)

    if masked:
        pos = jax.lax.broadcasted_iota(jnp.int32, (bb, t), 1)
        scores = jnp.where(pos < len_ref[...], scores, -1e18)                # == masked_fill(-1e18)

    # Row-wise softmax over T.
    m = jnp.max(scores, axis=-1, keepdims=True)
    p = jnp.exp(scores - m)
    denom = jnp.sum(p, axis=-1, keepdims=True)
    out_ref[...] = (p * pl.reciprocal(denom, approx=True)).astype(out_ref.dtype)


def attn_forward(hidden, encoder_outputs, W, b, v, src_len=None,
                 block_b=None, vmem_limit_bytes=None):
    """hidden: (1, B, H); encoder_outputs: (B, T, H); returns (B, 1, T) attention weights."""
    B, T, H = encoder_outputs.shape
    # The PyTorch module's repeat/concat only works for layers*directions == 1.
    assert hidden.shape == (1, B, H), hidden.shape

    # Fold hidden projection + linear bias into a per-batch bias (tiny XLA matmul).
    hid = jnp.transpose(hidden, (1, 0, 2)).reshape(B, H).astype(jnp.float32)
    hb = hid @ W[:, :H].T.astype(jnp.float32) + b[None, :].astype(jnp.float32)   # (B, H) f32
    We_t = W[:, H:].T.astype(jnp.bfloat16)                                        # (H, H) bf16
    v2 = v.reshape(1, H).astype(jnp.float32)

    # Keep T a multiple of 8 so the in-kernel reshapes don't relayout (rarely needed).
    enc = encoder_outputs
    Tp = T if T % 8 == 0 else ((T + 7) // 8) * 8
    if Tp != T:
        enc = jnp.pad(enc, ((0, 0), (0, Tp - T), (0, 0)))

    masked = (src_len is not None) or (Tp != T)
    lens = None
    if masked:
        if src_len is None:
            lens = jnp.full((B, 1), T, dtype=jnp.int32)
        else:
            lens = jnp.minimum(src_len.astype(jnp.int32), T).reshape(B, 1)

    # ---- per-step tile sizing from the VMEM budget (re-derived per generation) ----
    if vmem_limit_bytes is None:
        try:
            cap = int(getattr(pltpu.get_tpu_info(), "vmem_capacity_bytes", 0)) or (64 << 20)
        except Exception:
            cap = 64 << 20                                  # conservative: v7x per-core VMEM
        vmem_limit_bytes = min(max(cap // 2, 32 << 20), 64 << 20)
    vmem_limit_bytes = int(vmem_limit_bytes)

    elem = jnp.dtype(enc.dtype).itemsize
    if block_b is None:
        # Per streamed encoder element: 2x double-buffered input + bf16 copy + f32 pre/energy.
        per_elem = 2 * elem + 2 + 8
        avail = max(1 << 20, (2 * vmem_limit_bytes) // 3 - 4 * H * H)   # headroom for We/out/etc.
        rows = max(8, avail // (per_elem * H))
        bb = max(1, rows // max(Tp, 1))
        if B >= 16:
            bb = min(bb, -(-B // 2))          # >= 2 grid steps so v7x can use both TensorCores
    else:
        bb = int(block_b)
    bb = min(bb, B)
    if bb < B:
        bb = min(B, max(8, (bb // 8) * 8))    # sublane-align (bb, *) blocks when bb < B
    nb = -(-B // bb)                          # cdiv; last block may be partial (Pallas clamps)

    kernel = functools.partial(attn_kernel, masked=masked)
    in_specs = [
        pl.BlockSpec((bb, Tp, H), lambda i: (i, 0, 0)),   # encoder block, native dtype
        pl.BlockSpec((H, H), lambda i: (0, 0)),           # We^T (constant index -> resident)
        pl.BlockSpec((bb, H), lambda i: (i, 0)),          # folded hidden bias
        pl.BlockSpec((1, H), lambda i: (0, 0)),           # v
    ]
    args = [enc, We_t, hb, v2]
    if masked:
        in_specs.append(pl.BlockSpec((bb, 1), lambda i: (i, 0)))   # per-batch valid lengths
        args.append(lens)

    out2d = pl.pallas_call(
        kernel,
        out_shape=jax.ShapeDtypeStruct((B, Tp), jnp.float32),
        grid_spec=pltpu.PrefetchScalarGridSpec(
            num_scalar_prefetch=0,
            grid=(nb,),
            in_specs=in_specs,
            out_specs=pl.BlockSpec((bb, Tp), lambda i: (i, 0)),
        ),
        compiler_params=pltpu.CompilerParams(
            dimension_semantics=("parallel",),
            vmem_limit_bytes=vmem_limit_bytes,
        ),
    )(*args)

    if Tp != T:
        out2d = out2d[:, :T]
    return out2d[:, None, :]                                        # (B, 1, T)


def attn_reference(hidden, encoder_outputs, W, b, v, src_len=None):
    """Pure-JAX f32 reference mirroring the PyTorch forward."""
    B, T, H = encoder_outputs.shape
    Hrep = jnp.broadcast_to(jnp.transpose(hidden, (1, 0, 2)), (B, T, H))   # (B, T, H)
    cat = jnp.concatenate([Hrep, encoder_outputs], axis=2)                 # (B, T, 2H)
    energy = jnp.tanh(cat @ W.T + b)                                       # (B, T, H)
    scores = jnp.einsum("bth,h->bt", energy, v)                            # (B, T)
    if src_len is not None:
        pos = jnp.arange(T)[None, :]
        scores = jnp.where(pos < src_len[:, None], scores, -1e18)
    return jax.nn.softmax(scores, axis=-1)[:, None, :]                     # (B, 1, T)


if __name__ == "__main__":
    def run_case(B, T, H, key, src_len=None, block_b=None):
        k_hid, k_enc, k_w, k_b, k_v = jax.random.split(key, 5)
        # nn.Linear(2H, H): W (H, 2H), b (H,) ~ U(-1/sqrt(2H), 1/sqrt(2H)); v ~ N(0, 1/sqrt(H))
        bound = 1.0 / math.sqrt(2 * H)
        W = jax.random.uniform(k_w, (H, 2 * H), jnp.float32, -bound, bound)
        b = jax.random.uniform(k_b, (H,), jnp.float32, -bound, bound)
        v = jax.random.normal(k_v, (H,), jnp.float32) * (1.0 / math.sqrt(H))
        hidden = jax.random.normal(k_hid, (1, B, H), jnp.float32)
        enc = jax.random.normal(k_enc, (B, T, H), jnp.float32)

        out = jax.block_until_ready(
            attn_forward(hidden, enc, W, b, v, src_len=src_len, block_b=block_b))
        ref = attn_reference(hidden, enc, W, b, v, src_len=src_len)
        assert out.shape == (B, 1, T), out.shape
        # bf16-streamed operands + approx reciprocal: loosened tolerance vs f32 reference.
        err = float(jnp.max(jnp.abs(out - ref)))
        assert jnp.allclose(out, ref, atol=2e-2, rtol=2e-2), err
        assert bool(jnp.all(jnp.isfinite(out)))
        return out

    key = jax.random.PRNGKey(0)
    k1, k2, k3, k4 = jax.random.split(key, 4)

    # Case 1: nominal small shapes — unmasked and masked paths.
    B, T, H = 2, 8, 32
    run_case(B, T, H, k1)
    out_m = run_case(B, T, H, k1, src_len=jnp.array([5, 8], dtype=jnp.int32))
    assert bool(jnp.allclose(out_m[0, 0, 5:], 0.0, atol=1e-6))   # masked positions ~0 weight

    # Case 2: multi-step grid, partial last batch block (B % bb != 0), T % 8 != 0
    # (exercises bb < B, in-wrapper T padding with implicit masking, masked + unmasked paths).
    B, T, H = 20, 12, 128
    run_case(B, T, H, k2, block_b=8)
    src_len = jax.random.randint(k3, (B,), 1, T + 1).astype(jnp.int32)
    run_case(B, T, H, k4, src_len=src_len, block_b=8)

    print("KERNEL_OK")
</pallas_src>

<mosaic_0001>
module attributes {stable_mosaic.version = 11 : i64} {
  func.func @attn_kernel(%arg0: i32, %arg1: memref<2x8x32xf32, #tpu.memory_space<vmem>>, %arg2: memref<32x32xbf16, #tpu.memory_space<vmem>>, %arg3: memref<2x32xf32, #tpu.memory_space<vmem>>, %arg4: memref<1x32xf32, #tpu.memory_space<vmem>>, %arg5: memref<2x8xf32, #tpu.memory_space<vmem>>) attributes {dimension_semantics = [#tpu.dimension_semantics<parallel>], iteration_bounds = array<i64: 1>, scalar_prefetch = 0 : i64, scratch_operands = 0 : i64, tpu.core_type = #tpu.core_type<tc>, window_params = [{transform_indices = @transform_0, window_bounds = array<i64: 2, 8, 32>}, {pipeline_mode = #tpu.pipeline_mode<synchronous>, transform_indices = @transform_1, window_bounds = array<i64: 32, 32>}, {transform_indices = @transform_2, window_bounds = array<i64: 2, 32>}, {pipeline_mode = #tpu.pipeline_mode<synchronous>, transform_indices = @transform_3, window_bounds = array<i64: 1, 32>}, {transform_indices = @transform_4, window_bounds = array<i64: 2, 8>}]} {
    %c0 = arith.constant 0 : index
    %c0_0 = arith.constant 0 : index
    %c0_1 = arith.constant 0 : index
    %0 = vector.load %arg1[%c0, %c0_0, %c0_1] : memref<2x8x32xf32, #tpu.memory_space<vmem>>, vector<2x8x32xf32>
    %1 = vector.shape_cast %0 : vector<2x8x32xf32> to vector<16x32xf32>
    %2 = arith.truncf %1 : vector<16x32xf32> to vector<16x32xbf16>
    %c0_2 = arith.constant 0 : index
    %c0_3 = arith.constant 0 : index
    %3 = vector.load %arg2[%c0_2, %c0_3] : memref<32x32xbf16, #tpu.memory_space<vmem>>, vector<32x32xbf16>
    %cst = arith.constant dense<0.000000e+00> : vector<16x32xf32>
    %4 = tpu.matmul %2, %3, %cst {dimension_numbers = #tpu.dot_dimension_numbers<[1], [0], [0], [1], [0, 0, 1, 1], [], []>} : vector<16x32xbf16>, vector<32x32xbf16>, vector<16x32xf32> -> vector<16x32xf32>
    %5 = vector.shape_cast %4 : vector<16x32xf32> to vector<2x8x32xf32>
    %c0_4 = arith.constant 0 : index
    %c0_5 = arith.constant 0 : index
    %6 = vector.load %arg3[%c0_4, %c0_5] : memref<2x32xf32, #tpu.memory_space<vmem>>, vector<2x32xf32>
    %7 = vector.shape_cast %6 : vector<2x32xf32> to vector<2x1x32xf32>
    %8 = vector.broadcast %7 : vector<2x1x32xf32> to vector<2x8x32xf32>
    %9 = arith.addf %5, %8 : vector<2x8x32xf32>
    %10 = math.tanh %9 : vector<2x8x32xf32>
    %c0_6 = arith.constant 0 : index
    %c0_7 = arith.constant 0 : index
    %11 = vector.load %arg4[%c0_6, %c0_7] : memref<1x32xf32, #tpu.memory_space<vmem>>, vector<1x32xf32>
    %12 = vector.shape_cast %11 : vector<1x32xf32> to vector<1x1x32xf32>
    %13 = vector.broadcast %12 : vector<1x1x32xf32> to vector<2x8x32xf32>
    %14 = arith.mulf %10, %13 : vector<2x8x32xf32>
    %cst_8 = arith.constant dense<0.000000e+00> : vector<2x8xf32>
    %15 = vector.multi_reduction <add>, %14, %cst_8 [2] : vector<2x8x32xf32> to vector<2x8xf32>
    %cst_9 = arith.constant dense<0xFF800000> : vector<2xf32>
    %16 = vector.multi_reduction <maximumf>, %15, %cst_9 [1] : vector<2x8xf32> to vector<2xf32>
    %17 = vector.shape_cast %16 : vector<2xf32> to vector<2x1xf32>
    %18 = vector.broadcast %17 : vector<2x1xf32> to vector<2x8xf32>
    %19 = arith.subf %15, %18 : vector<2x8xf32>
    %20 = math.exp %19 : vector<2x8xf32>
    %cst_10 = arith.constant dense<0.000000e+00> : vector<2xf32>
    %21 = vector.multi_reduction <add>, %20, %cst_10 [1] : vector<2x8xf32> to vector<2xf32>
    %22 = vector.shape_cast %21 : vector<2xf32> to vector<2x1xf32>
    %23 = tpu.reciprocal %22 {approx = true} : vector<2x1xf32> -> vector<2x1xf32>
    %24 = vector.broadcast %23 : vector<2x1xf32> to vector<2x8xf32>
    %25 = arith.mulf %20, %24 : vector<2x8xf32>
    %c0_11 = arith.constant 0 : index
    %c0_12 = arith.constant 0 : index
    %26 = vector.load %arg5[%c0_11, %c0_12] : memref<2x8xf32, #tpu.memory_space<vmem>>, vector<2x8xf32>
    tpu.vector_store %arg5[%c0_11, %c0_12], %25 {strides = array<i32>} : memref<2x8xf32, #tpu.memory_space<vmem>>, vector<2x8xf32>,
    return
  }
  func.func @transform_0(%arg0: i32) -> (i32, i32, i32) {
    %c0_i32 = arith.constant 0 : i32
    %c0_i32_0 = arith.constant 0 : i32
    %c0_i32_1 = arith.constant 0 : i32
    return %arg0, %c0_i32, %c0_i32_0 : i32, i32, i32
  }
  func.func @transform_1(%arg0: i32) -> (i32, i32) {
    %c0_i32 = arith.constant 0 : i32
    %c0_i32_0 = arith.constant 0 : i32
    %c0_i32_1 = arith.constant 0 : i32
    return %c0_i32, %c0_i32_0 : i32, i32
  }
  func.func @transform_2(%arg0: i32) -> (i32, i32) {
    %c0_i32 = arith.constant 0 : i32
    %c0_i32_0 = arith.constant 0 : i32
    return %arg0, %c0_i32 : i32, i32
  }
  func.func @transform_3(%arg0: i32) -> (i32, i32) {
    %c0_i32 = arith.constant 0 : i32
    %c0_i32_0 = arith.constant 0 : i32
    %c0_i32_1 = arith.constant 0 : i32
    return %c0_i32, %c0_i32_0 : i32, i32
  }
  func.func @transform_4(%arg0: i32) -> (i32, i32) {
    %c0_i32 = arith.constant 0 : i32
    %c0_i32_0 = arith.constant 0 : i32
    return %arg0, %c0_i32 : i32, i32
  }
}

</mosaic_0001>

<llo_original>
// kernel: tpu_custom_call.1
$region0: #{tpu_custom_call.1}
  #allocation0 [shape = 'u32[]', space=smem, size = 0x4, offset = 0x4, fixed_abs, tag = 'smem constant byte address 0x4 - core index']
  #allocation1 [shape = 'u32[144,128]{1,0:T(1,128)}', space=vmem, size = 0x12000, scoped, tag = 'internal scratch']
  %s0 = inlined_call_operand.hbm [shape: f32[2,8,32], index: 0, kind: input, shape index: {}]
  %s1 = inlined_call_operand.hbm [shape: bf16[32,32], index: 1, kind: input, shape index: {}]
  %s2 = inlined_call_operand.vmem [shape: f32[2,32], index: 2, kind: input, shape index: {}]
  %s3 = inlined_call_operand.vmem [shape: f32[1,32], index: 3, kind: input, shape index: {}]
  %s4 = inlined_call_operand.hbm [shape: f32[2,8], index: 4, kind: output, shape index: {}]
  %s5 = sld [smem:[#allocation0]]
  $region34: #{tpu_custom_call.1} parent=0
    _
  %s7 = ssub.s32 1, %s5
  %s8 = scalar_select 0, %s7, %s5
  $region1: #{tpu_custom_call.1} parent=0
    #allocation2 [shape = 'u8[8192]{0}', space=vmem, size = 0x2000, scoped, tag = 'input window, operand 0, single buffered']
    #allocation3 [shape = 's32[1]{0}', space=sflag, size = 0x4, scoped, tag = 'scoped memory for tpu_custom_call.1']
    #allocation4 [shape = 's32[1]{0}', space=sflag, size = 0x4, scoped, tag = 'scoped memory for tpu_custom_call.1']
    #allocation5 [shape = 'u8[8192]{0}', space=vmem, size = 0x2000, scoped, tag = 'input window, operand 1, single buffered']
    #allocation6 [shape = 's32[1]{0}', space=sflag, size = 0x4, scoped, tag = 'scoped memory for tpu_custom_call.1']
    #allocation7 [shape = 'u8[1024]{0}', space=vmem, size = 0x400, scoped, tag = 'output window, operand 0, single buffered']
    %9 = vsyncpa [#allocation3], 0
    %10 = vsyncpa [#allocation6], 0
    %11 = vsyncpa [#allocation4], 0
    // Predicated region
    $region2: #{tpu_custom_call.1} parent=1 // pred_check
      _
    $region3: #{tpu_custom_call.1} parent=1 // pred_check_branch
      %13 = sbr.rel (0) target = $region5
    $region4: #{tpu_custom_call.1} parent=1 // pred_region
      %s15 = ssub.s32 256, 256
      %16 = vsyncadd [#allocation3], %s15
      %s17 = sshll.u32 [#allocation2], 4
      %s18 = int_to_ptr.vmem [resolvable:$true] %s17
      %23 = dma.hbm_to_vmem [thread:$0]  %s0, 256, %s18, [#allocation3], 128, 128, 8
    $region5: #{tpu_custom_call.1} parent=1 // pred_fallthru
      _
    // Predicated region
    $region6: #{tpu_custom_call.1} parent=1 // pred_check
      _
    $region7: #{tpu_custom_call.1} parent=1 // pred_check_branch
      %25 = sbr.rel (0) target = $region9
    $region8: #{tpu_custom_call.1} parent=1 // pred_region
      %s27 = ssub.s32 256, 256
      %28 = vsyncadd [#allocation6], %s27
      %s29 = sshll.u32 [#allocation5], 4
      %s30 = int_to_ptr.vmem [resolvable:$true] %s29
      %35 = dma.hbm_to_vmem [thread:$0]  %s1, 256, %s30, [#allocation6], 64, 64, 4
    $region9: #{tpu_custom_call.1} parent=1 // pred_fallthru
      _
    // Predicated region
    $region10: #{tpu_custom_call.1} parent=1 // pred_check
      _
    $region11: #{tpu_custom_call.1} parent=1 // pred_check_branch
      %37 = sbr.rel (0) target = $region13
    $region12: #{tpu_custom_call.1} parent=1 // pred_region
      _
    $region13: #{tpu_custom_call.1} parent=1 // pred_fallthru
      _
    // Predicated region
    $region14: #{tpu_custom_call.1} parent=1 // pred_check
      _
    $region15: #{tpu_custom_call.1} parent=1 // pred_check_branch
      %39 = sbr.rel (0) target = $region17
    $region16: #{tpu_custom_call.1} parent=1 // pred_region
      _
    $region17: #{tpu_custom_call.1} parent=1 // pred_fallthru
      _
    // Predicated region
    $region18: #{tpu_custom_call.1} parent=1 // pred_check
      _
    $region19: #{tpu_custom_call.1} parent=1 // pred_check_branch
      %41 = sbr.rel (0) target = $region21
    $region20: #{tpu_custom_call.1} parent=1 // pred_region
      %42 = dma.done [#allocation3], 256
    $region21: #{tpu_custom_call.1} parent=1 // pred_fallthru
      _
    // Predicated region
    $region22: #{tpu_custom_call.1} parent=1 // pred_check
      _
    $region23: #{tpu_custom_call.1} parent=1 // pred_check_branch
      %44 = sbr.rel (0) target = $region25
    $region24: #{tpu_custom_call.1} parent=1 // pred_region
      %45 = dma.done [#allocation6], 256
    $region25: #{tpu_custom_call.1} parent=1 // pred_fallthru
      _
    %v47 = vld [vmem:[#allocation2] sm:$0xff]
    %v48 = vld [vmem:[#allocation2 + $0x8] sm:$0xff]
    %v49 = vpack.c.bf16 %v48, %v47
    %v50 = vld [vmem:[#allocation5] sm:$0xf]
    %v51 = vld [vmem:[#allocation5 + $0x4] sm:$0xf]
    %v52 = vld [vmem:[#allocation5 + $0x8] sm:$0xf]
    %v53 = vld [vmem:[#allocation5 + $0xc] sm:$0xf]
    %v58 = vunpack.c.l.b16 %v50
    %v59 = vunpack.c.l.b16 %v51
    %v60 = vunpack.c.l.b16 %v52
    %v61 = vunpack.c.l.b16 %v53
    %v62 = vpack.c.b16 %v59, %v58
    %v63 = vpack.c.b16 %v61, %v60
    %vm66 = vcmask 261120
    %v68 = vsel %vm66, %v49, 0
    %70 = vmatprep.subr.bf16.mxu0 0
    %71 = vmatpush1.bf16.msra.mxu0 0
    %72 = vmatprep.subr.bf16.mxu0 0
    %73 = vmatpush1.bf16.msra.mxu0 0
    %74 = vmatprep.subr.bf16.mxu0 0
    %75 = vmatpush1.bf16.msra.mxu0 0
    %76 = vmatprep.subr.bf16.mxu0 0
    %77 = vmatpush1.bf16.msra.mxu0 0
    %78 = vmatprep.subr.bf16.mxu0 0
    %79 = vmatpush1.bf16.msra.mxu0 0
    %80 = vmatprep.subr.bf16.mxu0 0
    %81 = vmatpush1.bf16.msra.mxu0 0
    %82 = vmatprep.subr.bf16.mxu0 0
    %83 = vmatpush1.bf16.msra.mxu0 %v63
    %84 = vmatprep.subr.bf16.mxu0 0
    %85 = vmatpush1.bf16.msra.mxu0 %v62
    %86 = vmatprep.subr.bf16.mxu0 0
    %87 = vmatpush2.bf16.msra.mxu0 0
    %88 = vmatprep.subr.bf16.mxu0 0
    %89 = vmatpush2.bf16.msra.mxu0 0
    %90 = vmatprep.subr.bf16.mxu0 0
    %91 = vmatpush2.bf16.msra.mxu0 0
    %92 = vmatprep.subr.bf16.mxu0 0
    %93 = vmatpush2.bf16.msra.mxu0 0
    %94 = vmatprep.subr.bf16.mxu0 0
    %95 = vmatpush2.bf16.msra.mxu0 0
    %96 = vmatprep.subr.bf16.mxu0 0
    %97 = vmatpush2.bf16.msra.mxu0 0
    %98 = vmatprep.subr.bf16.mxu0 0
    %99 = vmatpush2.bf16.msra.mxu0 0
    %100 = vmatprep.subr.bf16.mxu0 0
    %101 = vmatpush2.bf16.msra.mxu0 0
    %102 = vmatprep.mubr.bf16.mxu0 0
    %103 = vmatmul.mubr.bf16.gmra.mxu0 %v68
    %v104 = vpop.f32.mrf.mxu0
    %v105 = vadd.f32 0.0, %v104
    %v106 = vpop.f32.mrf.mxu0
    %v107 = vpop.f32.mrf.mxu0
    %v108 = vadd.f32 0.0, %v107
    %v109 = vpop.f32.mrf.mxu0
    %110 = vdwg.mxu0
    %v111 = vld [vmem:[%s2] sm:$0x3]
    %v114 = vunpack.c.l.s4 1966171168
    %v115 = vunpack.c.0.s8 %v114
    %v116 = vlaneseq
    %v117 = vshrl.u32 %v116, 7
    %v118 = vsub.s32 %v115, %v117
    %v119 = vrot.slane %v111, %v118
    %v120 = vcombine.high %v119, %v119
    %v122 = vunpack.c.l.s4 1966171168
    %v123 = vunpack.c.0.s8 %v122
    %v124 = vlaneseq
    %v125 = vshrl.u32 %v124, 7
    %v126 = vsub.s32 %v123, %v125
    %v127 = vrot.slane %v119, %v126
    %v129 = vunpack.c.l.s4 1966171168
    %v130 = vunpack.c.0.s8 %v129
    %v131 = vlaneseq
    %v132 = vshrl.u32 %v131, 7
    %v133 = vsub.s32 %v130, %v132
    %v134 = vrot.slane %v120, %v133
    %v135 = vlaneseq
    %v136 = vshrl.u32 %v135, 7
    %v137 = vsub.s32 0, %v136
    %v138 = vrot.slane %v127, %v137
    %v139 = vlaneseq
    %v140 = vshrl.u32 %v139, 7
    %v141 = vsub.s32 0, %v140
    %v142 = vrot.slane %v134, %v141
    %v145 = vadd.f32 %v105, %v138
    %v146 = vadd.f32 %v108, %v142
    %v147 = vtanh.pop %v145
    %v148 = vtanh.pop %v146
    %v149 = vld [vmem:[%s3] sm:$0x1]
    %v151 = vlaneseq
    %v152 = vshrl.u32 %v151, 7
    %v153 = vsub.s32 0, %v152
    %v154 = vrot.slane %v149, %v153
    %v156 = vmul.f32 %v147, %v154
    %v157 = vmul.f32 %v148, %v154
    %v158 = vsel %vm66, %v156, 0.0
    %159 = vadd.xlane.f32.xlu0 %v158
    %v160 = vpop.xlane.xlu0 %159
    %v161 = vsel %vm66, %v157, 0.0
    %162 = vadd.xlane.f32.xlu0 %v161
    %v163 = vpop.xlane.xlu0 %162
    %v166 = vlaneseq
    %v167 = vand.u32 %v166, 127
    %v168 = vlaneseq
    %v169 = vshrl.u32 %v168, 7
    %v170 = vsub.s32 %v167, %v169
    %v171 = vrot.slane %v160, %v170
    %v172 = vlaneseq
    %v173 = vshrl.u32 %v172, 7
    %v174 = vsub.s32 %v167, %v173
    %v175 = vrot.slane %v163, %v174
    %vm176 = vcmask 1041409
    %v177 = vsel %vm176, %v175, %v171
    %vm179 = vcmask 58368
    %v180 = vsel %vm179, %v177, -inf
    %181 = vmax.xlane.f32.xlu0 %v180
    %v182 = vpop.xlane.xlu0 %181
    %v184 = vlaneseq
    %v185 = vshrl.u32 %v184, 7
    %v186 = vsub.s32 0, %v185
    %v187 = vrot.slane %v182, %v186
    %v188 = vlaneseq
    %v189 = vshrl.u32 %v188, 7
    %v190 = vsub.s32 1, %v189
    %v191 = vrot.slane %v182, %v190
    %v194 = vsub.f32 %v160, %v187
    %v195 = vsub.f32 %v163, %v191
    %v196 = vmul.f32 %v194, 1.442695
    %v197 = vpow.pop %v196
    %v198 = vmul.f32 %v195, 1.442695
    %v199 = vpow.pop %v198
    %202 = vset.pattern.permute.xlu0 0
    %203 = vperm.xlu0 %202, %v197
    %v204 = vpop.permute.xlu0 %203
    %205 = vset.pattern.permute.xlu0 0
    %206 = vperm.xlu0 %205, %v199
    %v207 = vpop.permute.xlu0 %206
    %v208 = vlaneseq
    %v209 = vshrl.u32 %v208, 7
    %v210 = vsub.s32 %v167, %v209
    %v211 = vrot.slane %v204, %v210
    %v212 = vlaneseq
    %v213 = vshrl.u32 %v212, 7
    %v214 = vsub.s32 %v167, %v213
    %v215 = vrot.slane %v207, %v214
    %v216 = vsel %vm176, %v215, %v211
    %v218 = vsel %vm179, %v216, 0.0
    %219 = vadd.xlane.f32.xlu0 %v218
    %v220 = vpop.xlane.xlu0 %219
    %v221 = vrcp.pop %v220
    %v223 = vlaneseq
    %v224 = vshrl.u32 %v223, 7
    %v225 = vsub.s32 0, %v224
    %v226 = vrot.slane %v221, %v225
    %v227 = vlaneseq
    %v228 = vshrl.u32 %v227, 7
    %v229 = vsub.s32 1, %v228
    %v230 = vrot.slane %v221, %v229
    %v233 = vmul.f32 %v197, %v226
    %v234 = vmul.f32 %v199, %v230
    %237 = vset.pattern.permute.xlu0 0
    %238 = vperm.xlu0 %237, %v233
    %v239 = vpop.permute.xlu0 %238
    %240 = vset.pattern.permute.xlu0 0
    %241 = vperm.xlu0 %240, %v234
    %v242 = vpop.permute.xlu0 %241
    %v243 = vlaneseq
    %v244 = vshrl.u32 %v243, 7
    %v245 = vsub.s32 %v167, %v244
    %v246 = vrot.slane %v239, %v245
    %v247 = vlaneseq
    %v248 = vshrl.u32 %v247, 7
    %v249 = vsub.s32 %v167, %v248
    %v250 = vrot.slane %v242, %v249
    %v251 = vsel %vm176, %v250, %v246
    %253 = vst.msk [vmem:[#allocation7] sm:$0x3] %vm179, %v251
    // Predicated region
    $region26: #{tpu_custom_call.1} parent=1 // pred_check
      _
    $region27: #{tpu_custom_call.1} parent=1 // pred_check_branch
      %255 = sbr.rel (0) target = $region29
    $region28: #{tpu_custom_call.1} parent=1 // pred_region
      %s257 = ssub.s32 32, 32
      %258 = vsyncadd [#allocation4], %s257
      %s260 = sshll.u32 [#allocation7], 4
      %s261 = int_to_ptr.vmem [resolvable:$true] %s260
      %263 = dma.vmem_to_hbm [thread:$0]  %s261, 32, %s4, [#allocation4]
    $region29: #{tpu_custom_call.1} parent=1 // pred_fallthru
      _
    // Predicated region
    $region30: #{tpu_custom_call.1} parent=1 // pred_check
      _
    $region31: #{tpu_custom_call.1} parent=1 // pred_check_branch
      %265 = sbr.rel (0) target = $region33
    $region32: #{tpu_custom_call.1} parent=1 // pred_region
      %266 = dma.done [#allocation4], 32
    $region33: #{tpu_custom_call.1} parent=1 // pred_fallthru
      _
    %267 = vsyncpa [#allocation3], 1
    %268 = vsyncpa [#allocation6], 1
    %269 = vsyncpa [#allocation4], 1

</llo_original>
